<compile_context>
chip_gen: v7x
topology: tpu7x:2x2x1
jax: 0.10.0
libtpu: 0.0.40
codegen_flags: <defaults>
</compile_context>

<pallas_src>
import functools

import jax
import jax.numpy as jnp
import numpy as np
from jax.experimental import pallas as pl
from jax.experimental.pallas import tpu as pltpu


def _stem_kernel(x_ref, w_ref, b_ref, o_ref, *,
                 KH, KW, R, W_out, band_Hp, W_pool, TCin, NC):
    """Fused stem for one (sample, H-band).

    x_ref : (4, R+1, Wh, TCin)   phase-split padded input band (phase = 2*(kh%2)+(kw%2)),
                                 lanes = fused (Tp, Cin); rows cover conv rows [-1, band_h)
                                 of this band (1-row halo on each side).
    w_ref : (KH*KW*TCin, NC)     banded conv weights, bf16, BN scale folded in;
                                 columns = fused (T_out, Cout).
    b_ref : (1, NC)              BN bias broadcast over T_out (f32).
    o_ref : (band_Hp*W_pool, NC) pooled band, 2D lane/sublane-dense store.
    """
    xv = x_ref[...]                                             # f32

    # ---- im2col: 9 unit-stride tap slices concatenated on the lane axis -----------
    cols = []
    for kh in range(KH):
        ph, oh = kh % 2, kh // 2
        for kw in range(KW):
            pw, ow = kw % 2, kw // 2
            cols.append(xv[2 * ph + pw, oh:oh + R, ow:ow + W_out, :])
    pat = jnp.concatenate(cols, axis=-1)                        # (R, W_out, KH*KW*TCin)
    pat = pat.reshape(R * W_out, KH * KW * TCin).astype(jnp.bfloat16)

    # ---- Conv3d as ONE bf16 MXU matmul (temporal taps + BN scale folded in) -------
    y = jnp.dot(pat, w_ref[...], preferred_element_type=jnp.float32)   # (R*W_out, NC) f32

    # ---- BatchNorm bias (scale already in the weights) + ReLU ---------------------
    y = jnp.maximum(y + b_ref[...], 0.0)
    y3 = y.reshape(R, W_out, NC)

    # Conv row r=0 of band 0 is the pool's zero-padding row (global conv row -1):
    # mask it.  Post-ReLU values are >= 0, so 0 == MaxPool padding.
    band = pl.program_id(1)
    row = jax.lax.broadcasted_iota(jnp.int32, (R, 1, 1), 0)
    y3 = jnp.where((row > 0) | (band > 0), y3, 0.0)

    # ---- H max-pool (k=3, s=2): pooled row j uses local conv rows 2j, 2j+1, 2j+2 ---
    band_h = R - 1
    a = y3[0:band_h].reshape(band_Hp, 2, W_out, NC)             # rows 2j / 2j+1
    b2 = y3[1:R].reshape(band_Hp, 2, W_out, NC)                 # rows 2j+1 / 2j+2
    pool_h = jnp.maximum(jnp.maximum(a[:, 0], a[:, 1]), b2[:, 1])       # (band_Hp, W_out, NC)

    # ---- W window max via two zero-padded sublane shifts (VPU/XLU) ------------------
    zcol = jnp.zeros((band_Hp, 1, NC), jnp.float32)
    left = jnp.concatenate([zcol, pool_h[:, :W_out - 1, :]], axis=1)    # pool_h[w-1]
    right = jnp.concatenate([pool_h[:, 1:, :], zcol], axis=1)           # pool_h[w+1]
    win = jnp.maximum(jnp.maximum(pool_h, left), right)                 # (band_Hp, W_out, NC)

    # ---- stride-2 W decimation as ONE 0/1 selection matmul (exact for 0/1 rows) ----
    jj = jax.lax.broadcasted_iota(jnp.int32, (W_pool, W_out), 0)
    ww = jax.lax.broadcasted_iota(jnp.int32, (W_pool, W_out), 1)
    sel = (ww == 2 * jj).astype(jnp.bfloat16)                           # (W_pool, W_out)
    selb = jnp.broadcast_to(sel[None], (band_Hp, W_pool, W_out))
    pooled = jnp.einsum('hjw,hwl->hjl', selb, win.astype(jnp.bfloat16),
                        preferred_element_type=jnp.float32)             # (band_Hp, W_pool, NC)

    # ---- lane/sublane-dense 2D store (W_pool is a multiple of 8) --------------------
    o_ref[...] = pooled.reshape(band_Hp * W_pool, NC)


def _banded_conv_weight(w, scale, Tp, T_out):
    """(Cout, Cin, KT, KH, KW) -> (KH*KW*Tp*Cin, T_out*Cout) with the temporal
    convolution (kt = tin - tout) and the BatchNorm scale folded in."""
    Cout, Cin, KT, KH, KW = w.shape
    w_s = w * scale[:, None, None, None, None]
    wt = jnp.transpose(w_s, (3, 4, 2, 1, 0))              # (KH, KW, KT, Cin, Cout)
    tin = jnp.arange(Tp)[:, None]
    tout = jnp.arange(T_out)[None, :]
    kt = tin - tout                                       # (Tp, T_out)
    valid = (kt >= 0) & (kt < KT)
    a = wt[:, :, jnp.clip(kt, 0, KT - 1), :, :]           # (KH, KW, Tp, T_out, Cin, Cout)
    a = jnp.where(valid[None, None, :, :, None, None], a, 0.0)
    a = jnp.transpose(a, (0, 1, 2, 4, 3, 5))              # (KH, KW, Tp, Cin, T_out, Cout)
    return a.reshape(KH * KW * Tp * Cin, T_out * Cout)


def _auto_band_h(H_out, W_out, Wh, TCin, Ktot, NC, W_pool, budget_bytes):
    """Largest even divisor of H_out whose rough per-band VMEM estimate fits the budget."""
    def _lane(n):
        return ((n + 127) // 128) * 128

    def _sub(n, m=8):
        return ((n + m - 1) // m) * m

    best = 2
    for bh in range(2, H_out + 1, 2):
        if H_out % bh != 0:
            continue
        R = bh + 1
        hp = bh // 2
        est = (
            2 * 4 * (bh + 2) * _sub(Wh) * _lane(TCin) * 4         # double-buffered input band (f32)
            + _sub(R * W_out) * _lane(Ktot) * (4 + 2)             # im2col patches (f32 + bf16 cast)
            + _sub(R * W_out) * _lane(NC) * 4                     # conv/BN/ReLU result (f32)
            + 4 * _sub(hp * W_out) * _lane(NC) * 4                # pooling temporaries (f32)
            + 2 * _sub(hp * W_pool) * _lane(NC) * 4               # double-buffered output band
            + _sub(Ktot, 16) * _lane(NC) * 2 + _lane(NC) * 4      # resident weights + bias
        )
        if est <= budget_bytes:
            best = bh
    return best


def video_model_stem(x, w, gamma, beta, running_mean, running_var, eps=1e-5, band_h=None):
    """x: (N, C, T, H, W); w: (Cout, Cin, 3, 3, 3).  Conv3d(stride (1,2,2), pad (1,1,1),
    no bias) -> BN(inference) -> ReLU -> MaxPool3d((1,3,3),(1,2,2),(0,1,1)); NCTHW out."""
    N, Cin, T, H, W = x.shape
    Cout, Cin_w, KT, KH, KW = w.shape
    assert Cin == Cin_w and (KT, KH, KW) == (3, 3, 3)
    assert H % 4 == 0, "stem kernel assumes H divisible by 4"
    assert W % 32 == 0, "stem kernel assumes W divisible by 32 (W_pool multiple of 8)"

    ST, SH, SW = 1, 2, 2
    PT, PH, PW = 1, 1, 1
    T_out = (T + 2 * PT - KT) // ST + 1                   # == T
    H_out = (H + 2 * PH - KH) // SH + 1                   # == H // 2
    W_out = (W + 2 * PW - KW) // SW + 1                   # == W // 2
    H_pool, W_pool = H_out // 2, W_out // 2

    Tp, Hp, Wp = T + 2 * PT, H + 2 * PH, W + 2 * PW
    Hh, Wh = Hp // 2, Wp // 2                             # H_out + 1, W_out + 1
    TCin = Tp * Cin
    NC = T_out * Cout
    Ktot = KH * KW * TCin

    # ---- per-generation VMEM budget (v7x: 64 MiB -> 48; v5e/v6e: 128 MiB -> 96) ----
    try:
        cap = int(pltpu.get_tpu_info().vmem_capacity_bytes)
    except Exception:
        cap = 64 * 1024 * 1024
    vmem_limit = min((cap * 3) // 4, 112 * 1024 * 1024)

    if band_h is None:
        band_h = _auto_band_h(H_out, W_out, Wh, TCin, Ktot, NC, W_pool,
                              (vmem_limit * 6) // 10)
    assert band_h % 2 == 0 and H_out % band_h == 0, (band_h, H_out)
    n_bands = H_out // band_h
    band_Hp = band_h // 2
    R = band_h + 1                                        # conv rows computed per band

    # ---- glue (XLA): zero-pad, phase-split H/W, fuse (T, Cin) on lanes, band + halo
    x_t = jnp.transpose(x, (0, 3, 4, 2, 1)).astype(jnp.float32)       # (N, H, W, T, Cin)
    x_p = jnp.pad(x_t, ((0, 0), (PH, PH), (PW, PW), (PT, PT), (0, 0)))
    x_ph = x_p.reshape(N, Hh, 2, Wh, 2, TCin)
    x_ph = jnp.transpose(x_ph, (0, 2, 4, 1, 3, 5)).reshape(N, 4, Hh, Wh, TCin)
    x_ext = jnp.pad(x_ph, ((0, 0), (0, 0), (1, 0), (0, 0), (0, 0)))   # dummy row for band 0
    x_bands = jnp.stack(
        [x_ext[:, :, b * band_h: b * band_h + band_h + 2] for b in range(n_bands)],
        axis=1)                                           # (N, n_bands, 4, band_h+2, Wh, TCin)

    # ---- fold BatchNorm: scale into the conv weights (bf16), bias as a (1, NC) row --
    scale = (gamma / jnp.sqrt(running_var + eps)).astype(jnp.float32)
    bias = (beta - running_mean * scale).astype(jnp.float32)
    w_mat = _banded_conv_weight(w.astype(jnp.float32), scale, Tp, T_out)
    w_mat = w_mat.astype(jnp.bfloat16)                    # (Ktot, NC)
    bias_row = jnp.broadcast_to(bias, (T_out, Cout)).reshape(1, NC)

    kernel = functools.partial(
        _stem_kernel, KH=KH, KW=KW, R=R, W_out=W_out,
        band_Hp=band_Hp, W_pool=W_pool, TCin=TCin, NC=NC)

    out = pl.pallas_call(
        kernel,
        out_shape=jax.ShapeDtypeStruct((N, n_bands, band_Hp * W_pool, NC), jnp.float32),
        grid=(N, n_bands),
        in_specs=[
            pl.BlockSpec((None, None, 4, band_h + 2, Wh, TCin),
                         lambda n, b: (n, b, 0, 0, 0, 0)),
            pl.BlockSpec((Ktot, NC), lambda n, b: (0, 0)),   # VMEM-resident across the grid
            pl.BlockSpec((1, NC), lambda n, b: (0, 0)),
        ],
        out_specs=pl.BlockSpec((None, None, band_Hp * W_pool, NC),
                               lambda n, b: (n, b, 0, 0)),
        compiler_params=pltpu.CompilerParams(
            dimension_semantics=("parallel", "parallel"),
            vmem_limit_bytes=vmem_limit),
    )(x_bands, w_mat, bias_row)

    # back to PyTorch NCTHW
    out = out.reshape(N, n_bands, band_Hp, W_pool, T_out, Cout)
    out = jnp.transpose(out, (0, 5, 4, 1, 2, 3)).reshape(N, Cout, T_out, H_pool, W_pool)
    return out


if __name__ == "__main__":
    key = jax.random.PRNGKey(0)
    k1, k2, k3, k4, k5, k6 = jax.random.split(key, 6)

    # dim_in=[4], dim_out=[16], kernel=[[3,3,3]], stride=[[1,2,2]], padding=[[1,1,1]]
    N, Cin, T, H, W = 2, 4, 4, 16, 32
    Cout, KT, KH, KW = 16, 3, 3, 3
    eps = 1e-5

    x = jax.random.normal(k1, (N, Cin, T, H, W), jnp.float32)
    w = 0.1 * jax.random.normal(k2, (Cout, Cin, KT, KH, KW), jnp.float32)
    gamma = 1.0 + 0.1 * jax.random.normal(k3, (Cout,), jnp.float32)
    beta = 0.1 * jax.random.normal(k4, (Cout,), jnp.float32)
    rmean = 0.1 * jax.random.normal(k5, (Cout,), jnp.float32)
    rvar = 1.0 + 0.1 * jnp.abs(jax.random.normal(k6, (Cout,), jnp.float32))

    # multi-band path (2 H-bands) and auto-sized single-band path
    out_banded = jax.block_until_ready(
        video_model_stem(x, w, gamma, beta, rmean, rvar, eps, band_h=4))
    out_auto = jax.block_until_ready(
        video_model_stem(x, w, gamma, beta, rmean, rvar, eps, band_h=None))

    # pure-JAX reference (Conv3d -> BN(inference) -> ReLU -> MaxPool3d), f32
    conv = jax.lax.conv_general_dilated(
        x, w, window_strides=(1, 2, 2),
        padding=((1, 1), (1, 1), (1, 1)),
        dimension_numbers=("NCDHW", "OIDHW", "NCDHW"),
        precision=jax.lax.Precision.HIGHEST)
    bshape = (1, Cout, 1, 1, 1)
    bn = ((conv - rmean.reshape(bshape)) / jnp.sqrt(rvar.reshape(bshape) + eps)
          * gamma.reshape(bshape) + beta.reshape(bshape))
    relu = jnp.maximum(bn, 0.0)
    ref = jax.lax.reduce_window(
        relu, -jnp.inf, jax.lax.max,
        window_dimensions=(1, 1, 1, 3, 3),
        window_strides=(1, 1, 1, 2, 2),
        padding=((0, 0), (0, 0), (0, 0), (1, 1), (1, 1)))

    # kernel uses bf16 MXU operands (f32 accumulation); compare with bf16-level tolerance
    for out in (out_banded, out_auto):
        assert out.shape == ref.shape, (out.shape, ref.shape)
        np.testing.assert_allclose(np.asarray(out), np.asarray(ref), rtol=3e-2, atol=3e-2)
    print("KERNEL_OK")
</pallas_src>

<mosaic_0001>
module attributes {stable_mosaic.version = 11 : i64} {
  func.func @_stem_kernel(%arg0: i32, %arg1: i32, %arg2: memref<1x1x4x6x17x24xf32, #tpu.memory_space<vmem>>, %arg3: memref<216x64xbf16, #tpu.memory_space<vmem>>, %arg4: memref<1x64xf32, #tpu.memory_space<vmem>>, %arg5: memref<1x1x16x64xf32, #tpu.memory_space<vmem>>) attributes {dimension_semantics = [#tpu.dimension_semantics<parallel>, #tpu.dimension_semantics<parallel>], iteration_bounds = array<i64: 2, 2>, scalar_prefetch = 0 : i64, scratch_operands = 0 : i64, tpu.core_type = #tpu.core_type<tc>, window_params = [{transform_indices = @transform_0, window_bounds = array<i64: 1, 1, 4, 6, 17, 24>}, {pipeline_mode = #tpu.pipeline_mode<synchronous>, transform_indices = @transform_1, window_bounds = array<i64: 216, 64>}, {pipeline_mode = #tpu.pipeline_mode<synchronous>, transform_indices = @transform_2, window_bounds = array<i64: 1, 64>}, {transform_indices = @transform_3, window_bounds = array<i64: 1, 1, 16, 64>}]} {
    %c0 = arith.constant 0 : index
    %c0_0 = arith.constant 0 : index
    %c0_1 = arith.constant 0 : index
    %c0_2 = arith.constant 0 : index
    %c0_3 = arith.constant 0 : index
    %c0_4 = arith.constant 0 : index
    %0 = vector.load %arg2[%c0, %c0_0, %c0_1, %c0_2, %c0_3, %c0_4] : memref<1x1x4x6x17x24xf32, #tpu.memory_space<vmem>>, vector<1x1x4x6x17x24xf32>
    %1 = vector.shape_cast %0 : vector<1x1x4x6x17x24xf32> to vector<4x6x17x24xf32>
    %2 = vector.extract_strided_slice %1 {offsets = [0, 0, 0, 0], sizes = [1, 5, 16, 24], strides = [1, 1, 1, 1]} : vector<4x6x17x24xf32> to vector<1x5x16x24xf32>
    %3 = vector.shape_cast %2 : vector<1x5x16x24xf32> to vector<5x16x24xf32>
    %4 = vector.extract_strided_slice %1 {offsets = [1, 0, 0, 0], sizes = [1, 5, 16, 24], strides = [1, 1, 1, 1]} : vector<4x6x17x24xf32> to vector<1x5x16x24xf32>
    %5 = vector.shape_cast %4 : vector<1x5x16x24xf32> to vector<5x16x24xf32>
    %6 = vector.extract_strided_slice %1 {offsets = [0, 0, 1, 0], sizes = [1, 5, 16, 24], strides = [1, 1, 1, 1]} : vector<4x6x17x24xf32> to vector<1x5x16x24xf32>
    %7 = vector.shape_cast %6 : vector<1x5x16x24xf32> to vector<5x16x24xf32>
    %8 = vector.extract_strided_slice %1 {offsets = [2, 0, 0, 0], sizes = [1, 5, 16, 24], strides = [1, 1, 1, 1]} : vector<4x6x17x24xf32> to vector<1x5x16x24xf32>
    %9 = vector.shape_cast %8 : vector<1x5x16x24xf32> to vector<5x16x24xf32>
    %10 = vector.extract_strided_slice %1 {offsets = [3, 0, 0, 0], sizes = [1, 5, 16, 24], strides = [1, 1, 1, 1]} : vector<4x6x17x24xf32> to vector<1x5x16x24xf32>
    %11 = vector.shape_cast %10 : vector<1x5x16x24xf32> to vector<5x16x24xf32>
    %12 = vector.extract_strided_slice %1 {offsets = [2, 0, 1, 0], sizes = [1, 5, 16, 24], strides = [1, 1, 1, 1]} : vector<4x6x17x24xf32> to vector<1x5x16x24xf32>
    %13 = vector.shape_cast %12 : vector<1x5x16x24xf32> to vector<5x16x24xf32>
    %14 = vector.extract_strided_slice %1 {offsets = [0, 1, 0, 0], sizes = [1, 5, 16, 24], strides = [1, 1, 1, 1]} : vector<4x6x17x24xf32> to vector<1x5x16x24xf32>
    %15 = vector.shape_cast %14 : vector<1x5x16x24xf32> to vector<5x16x24xf32>
    %16 = vector.extract_strided_slice %1 {offsets = [1, 1, 0, 0], sizes = [1, 5, 16, 24], strides = [1, 1, 1, 1]} : vector<4x6x17x24xf32> to vector<1x5x16x24xf32>
    %17 = vector.shape_cast %16 : vector<1x5x16x24xf32> to vector<5x16x24xf32>
    %18 = vector.extract_strided_slice %1 {offsets = [0, 1, 1, 0], sizes = [1, 5, 16, 24], strides = [1, 1, 1, 1]} : vector<4x6x17x24xf32> to vector<1x5x16x24xf32>
    %19 = vector.shape_cast %18 : vector<1x5x16x24xf32> to vector<5x16x24xf32>
    %20 = tpu.concatenate %3, %5, %7, %9, %11, %13, %15, %17, %19 in 2 : vector<5x16x24xf32>, vector<5x16x24xf32>, vector<5x16x24xf32>, vector<5x16x24xf32>, vector<5x16x24xf32>, vector<5x16x24xf32>, vector<5x16x24xf32>, vector<5x16x24xf32>, vector<5x16x24xf32> -> vector<5x16x216xf32>
    %21 = vector.shape_cast %20 : vector<5x16x216xf32> to vector<80x216xf32>
    %22 = arith.truncf %21 : vector<80x216xf32> to vector<80x216xbf16>
    %c0_5 = arith.constant 0 : index
    %c0_6 = arith.constant 0 : index
    %23 = vector.load %arg3[%c0_5, %c0_6] : memref<216x64xbf16, #tpu.memory_space<vmem>>, vector<216x64xbf16>
    %cst = arith.constant dense<0.000000e+00> : vector<80x64xf32>
    %24 = tpu.matmul %22, %23, %cst {dimension_numbers = #tpu.dot_dimension_numbers<[1], [0], [0], [1], [0, 0, 1, 1], [], []>} : vector<80x216xbf16>, vector<216x64xbf16>, vector<80x64xf32> -> vector<80x64xf32>
    %c0_7 = arith.constant 0 : index
    %c0_8 = arith.constant 0 : index
    %25 = vector.load %arg4[%c0_7, %c0_8] : memref<1x64xf32, #tpu.memory_space<vmem>>, vector<1x64xf32>
    %26 = vector.broadcast %25 : vector<1x64xf32> to vector<80x64xf32>
    %27 = arith.addf %24, %26 : vector<80x64xf32>
    %cst_9 = arith.constant 0.000000e+00 : f32
    %28 = vector.broadcast %cst_9 : f32 to vector<80x64xf32>
    %29 = arith.maximumf %27, %28 : vector<80x64xf32>
    %30 = vector.shape_cast %29 : vector<80x64xf32> to vector<5x16x64xf32>
    %31 = tpu.iota {dimensions = array<i32: 0>} : vector<5x1x1xi32>
    %c0_i32 = arith.constant 0 : i32
    %32 = vector.broadcast %c0_i32 : i32 to vector<5x1x1xi32>
    %33 = arith.cmpi sgt, %31, %32 : vector<5x1x1xi32>
    %c0_i32_10 = arith.constant 0 : i32
    %34 = arith.cmpi sgt, %arg1, %c0_i32_10 : i32
    %35 = vector.broadcast %34 : i1 to vector<5x1x1xi1>
    %36 = arith.ori %33, %35 : vector<5x1x1xi1>
    %cst_11 = arith.constant 0.000000e+00 : f32
    %37 = vector.shape_cast %36 : vector<5x1x1xi1> to vector<5x1x1xi1>
    %38 = vector.broadcast %37 : vector<5x1x1xi1> to vector<5x16x64xi1>
    %39 = vector.broadcast %cst_11 : f32 to vector<5x16x64xf32>
    %40 = arith.select %38, %30, %39 : vector<5x16x64xi1>, vector<5x16x64xf32>
    %41 = vector.extract_strided_slice %40 {offsets = [0, 0, 0], sizes = [4, 16, 64], strides = [1, 1, 1]} : vector<5x16x64xf32> to vector<4x16x64xf32>
    %42 = vector.shape_cast %41 : vector<4x16x64xf32> to vector<2x2x16x64xf32>
    %43 = vector.extract_strided_slice %40 {offsets = [1, 0, 0], sizes = [4, 16, 64], strides = [1, 1, 1]} : vector<5x16x64xf32> to vector<4x16x64xf32>
    %44 = vector.shape_cast %43 : vector<4x16x64xf32> to vector<2x2x16x64xf32>
    %45 = vector.extract_strided_slice %42 {offsets = [0, 0, 0, 0], sizes = [2, 1, 16, 64], strides = [1, 1, 1, 1]} : vector<2x2x16x64xf32> to vector<2x1x16x64xf32>
    %46 = vector.shape_cast %45 : vector<2x1x16x64xf32> to vector<2x16x64xf32>
    %47 = vector.extract_strided_slice %42 {offsets = [0, 1, 0, 0], sizes = [2, 1, 16, 64], strides = [1, 1, 1, 1]} : vector<2x2x16x64xf32> to vector<2x1x16x64xf32>
    %48 = vector.shape_cast %47 : vector<2x1x16x64xf32> to vector<2x16x64xf32>
    %49 = arith.maximumf %46, %48 : vector<2x16x64xf32>
    %50 = vector.extract_strided_slice %44 {offsets = [0, 1, 0, 0], sizes = [2, 1, 16, 64], strides = [1, 1, 1, 1]} : vector<2x2x16x64xf32> to vector<2x1x16x64xf32>
    %51 = vector.shape_cast %50 : vector<2x1x16x64xf32> to vector<2x16x64xf32>
    %52 = arith.maximumf %49, %51 : vector<2x16x64xf32>
    %cst_12 = arith.constant 0.000000e+00 : f32
    %53 = vector.broadcast %cst_12 : f32 to vector<2x1x64xf32>
    %54 = vector.extract_strided_slice %52 {offsets = [0, 0, 0], sizes = [2, 15, 64], strides = [1, 1, 1]} : vector<2x16x64xf32> to vector<2x15x64xf32>
    %55 = tpu.concatenate %53, %54 in 1 : vector<2x1x64xf32>, vector<2x15x64xf32> -> vector<2x16x64xf32>
    %56 = vector.extract_strided_slice %52 {offsets = [0, 1, 0], sizes = [2, 15, 64], strides = [1, 1, 1]} : vector<2x16x64xf32> to vector<2x15x64xf32>
    %57 = tpu.concatenate %56, %53 in 1 : vector<2x15x64xf32>, vector<2x1x64xf32> -> vector<2x16x64xf32>
    %58 = arith.maximumf %52, %55 : vector<2x16x64xf32>
    %59 = arith.maximumf %58, %57 : vector<2x16x64xf32>
    %60 = tpu.iota {dimensions = array<i32: 0>} : vector<8x16xi32>
    %61 = tpu.iota {dimensions = array<i32: 1>} : vector<8x16xi32>
    %c2_i32 = arith.constant 2 : i32
    %62 = vector.broadcast %c2_i32 : i32 to vector<8x16xi32>
    %63 = arith.muli %62, %60 : vector<8x16xi32>
    %64 = arith.cmpi eq, %61, %63 : vector<8x16xi32>
    %65 = arith.extui %64 : vector<8x16xi1> to vector<8x16xi32>
    %66 = arith.sitofp %65 : vector<8x16xi32> to vector<8x16xf32>
    %67 = arith.truncf %66 : vector<8x16xf32> to vector<8x16xbf16>
    %68 = vector.shape_cast %67 : vector<8x16xbf16> to vector<1x8x16xbf16>
    %69 = vector.shape_cast %68 : vector<1x8x16xbf16> to vector<1x8x16xbf16>
    %70 = vector.broadcast %69 : vector<1x8x16xbf16> to vector<2x8x16xbf16>
    %71 = arith.truncf %59 : vector<2x16x64xf32> to vector<2x16x64xbf16>
    "tpu.trace_start"() <{level = 10 : i32, message = "hjw,hwl->hjl"}> : () -> ()
    %cst_13 = arith.constant dense<0.000000e+00> : vector<2x8x64xf32>
    %72 = tpu.matmul %70, %71, %cst_13 {dimension_numbers = #tpu.dot_dimension_numbers<[2], [1], [1], [2], [0, 0, 0, 1, 1, 2], [0], [0]>} : vector<2x8x16xbf16>, vector<2x16x64xbf16>, vector<2x8x64xf32> -> vector<2x8x64xf32>
    "tpu.trace_stop"() : () -> ()
    %73 = vector.shape_cast %72 : vector<2x8x64xf32> to vector<16x64xf32>
    %c0_14 = arith.constant 0 : index
    %c0_15 = arith.constant 0 : index
    %c0_16 = arith.constant 0 : index
    %c0_17 = arith.constant 0 : index
    %74 = vector.load %arg5[%c0_14, %c0_15, %c0_16, %c0_17] : memref<1x1x16x64xf32, #tpu.memory_space<vmem>>, vector<1x1x16x64xf32>
    %75 = vector.shape_cast %74 : vector<1x1x16x64xf32> to vector<16x64xf32>
    %76 = vector.shape_cast %73 : vector<16x64xf32> to vector<1x1x16x64xf32>
    tpu.vector_store %arg5[%c0_14, %c0_15, %c0_16, %c0_17], %76 {strides = array<i32>} : memref<1x1x16x64xf32, #tpu.memory_space<vmem>>, vector<1x1x16x64xf32>,
    return
  }
  func.func @transform_0(%arg0: i32, %arg1: i32) -> (i32, i32, i32, i32, i32, i32) {
    %c0_i32 = arith.constant 0 : i32
    %c0_i32_0 = arith.constant 0 : i32
    %c0_i32_1 = arith.constant 0 : i32
    %c0_i32_2 = arith.constant 0 : i32
    %c0_i32_3 = arith.constant 0 : i32
    return %arg0, %arg1, %c0_i32, %c0_i32_0, %c0_i32_1, %c0_i32_2 : i32, i32, i32, i32, i32, i32
  }
  func.func @transform_1(%arg0: i32, %arg1: i32) -> (i32, i32) {
    %c0_i32 = arith.constant 0 : i32
    %c0_i32_0 = arith.constant 0 : i32
    %c0_i32_1 = arith.constant 0 : i32
    return %c0_i32, %c0_i32_0 : i32, i32
  }
  func.func @transform_2(%arg0: i32, %arg1: i32) -> (i32, i32) {
    %c0_i32 = arith.constant 0 : i32
    %c0_i32_0 = arith.constant 0 : i32
    %c0_i32_1 = arith.constant 0 : i32
    return %c0_i32, %c0_i32_0 : i32, i32
  }
  func.func @transform_3(%arg0: i32, %arg1: i32) -> (i32, i32, i32, i32) {
    %c0_i32 = arith.constant 0 : i32
    %c0_i32_0 = arith.constant 0 : i32
    %c0_i32_1 = arith.constant 0 : i32
    return %arg0, %arg1, %c0_i32, %c0_i32_0 : i32, i32, i32, i32
  }
}

</mosaic_0001>

<llo_original>
// kernel: tpu_custom_call.1
$region0: #{tpu_custom_call.1}
  #allocation0 [shape = 'u32[]', space=smem, size = 0x4, offset = 0x4, fixed_abs, tag = 'smem constant byte address 0x4 - core index']
  #allocation1 [shape = 'u32[144,128]{1,0:T(1,128)}', space=vmem, size = 0x12000, scoped, tag = 'internal scratch']
  %s0 = inlined_call_operand.vmem [shape: f32[2,2,4,6,17,24], index: 0, kind: input, shape index: {}]
  %s1 = inlined_call_operand.vmem [shape: bf16[216,64], index: 1, kind: input, shape index: {}]
  %s2 = inlined_call_operand.vmem [shape: f32[1,64], index: 2, kind: input, shape index: {}]
  %s3 = inlined_call_operand.hbm [shape: f32[2,2,16,64], index: 3, kind: output, shape index: {}]
  %s4 = sld [smem:[#allocation0]]
  $region45: #{tpu_custom_call.1} parent=0
    _
  %s6 = ssub.s32 1, %s4
  %s7 = scalar_select 0, %s6, %s4
  $region1: #{tpu_custom_call.1} parent=0
    #allocation2 [shape = 'u8[16384]{0}', space=vmem, size = 0x4000, scoped, tag = 'output window, operand 0']
    #allocation3 [shape = 's32[2]{0}', space=sflag, size = 0x8, scoped, tag = 'scoped memory for tpu_custom_call.1']
    %8 = vsyncpa [#allocation3], 0
    %s9 = scalar_lea.sflag [#allocation3], 1
    %10 = vsyncpa %s9, 0
    loop: start=0, step=1, limit=6
    $region2: #{tpu_custom_call.1} parent=1 // loop_pre_header
      _
    $region3: #{tpu_custom_call.1} parent=1 // loop_header
      %s12 = sphi 0, %s16
      %p13 = scmp.ge.s32.totalorder %s12, 6
      %s19 = sphi 0, %s31
      %s20 = sphi 0, %s27
      %s21 = sphi 0, %s19
      %s22 = sphi 0, %s20
      %s23 = sphi 0, %s21
      %s24 = sphi 0, %s22
      %s36 = sphi 0, %s38
      %s39 = sphi 0, %s36
      %s40 = sphi 0, %s39
      %s56 = sphi 0, %s40
      %s60 = sphi 0, %s60
      %s62 = sphi 0, %s60
      %s63 = sphi 0, %s62
      %s77 = sphi 0, %s63
      %s81 = sphi 0, %s81
      %s83 = sphi 0, %s81
      %s84 = sphi 0, %s83
      %s98 = sphi 0, %s84
      %s106 = sphi 0, %s108
      %s109 = sphi 0, %s106
      %s110 = sphi 0, %s109
      %s126 = sphi 0, %s110
    $region4: #{tpu_custom_call.1} parent=1 // loop_header_branch
      %15 = sbr.rel (%p13) target = $region8
    $region5: #{tpu_custom_call.1} parent=1 // loop_body
      %s17 = ssub.s32 %s12, 1
      %s18 = ssub.s32 %s12, 2
      %s25 = sadd.s32 1, %s20
      %p26 = scmp.ge.s32.totalorder %s25, 2
      %s27 = scalar_select %p26, 0, %s25
      %s28 = sadd.s32 1, %s19
      %s29 = scalar_select %p26, %s28, %s19
      %p30 = scmp.ge.s32.totalorder %s29, 2
      %s31 = scalar_select %p30, 0, %s29
      %s32 = ssub.s32 %s19, %s31
      %s33 = ssub.s32 %s20, %s27
      %s34 = sor.u32 %s32, %s33
      %p35 = scmp.eq.s32.totalorder %s34, 0
      %s37 = sadd.s32 %s36, 1
      %s38 = scalar_select %p35, %s36, %s37
      %p41 = pneg %p35
      %p42 = scmp.eq.s32.totalorder %s12, 3
      %p43 = por %p41, %p42
      %p44 = scmp.ne.s32.totalorder %s36, %s39
      %p45 = scmp.eq.s32.totalorder %s12, 0
      %p46 = por %p44, %p45
      %p47 = scmp.ne.s32.totalorder %s36, %s39
      %p48 = scmp.eq.s32.totalorder %s17, 3
      %p49 = por %p47, %p48
      %p50 = scmp.ne.s32.totalorder %s39, %s40
      %p51 = scmp.eq.s32.totalorder %s17, 0
      %p52 = por %p50, %p51
      %p53 = scmp.ne.s32.totalorder %s39, %s40
      %p54 = scmp.eq.s32.totalorder %s18, 3
      %p55 = por %p53, %p54
      %p57 = scmp.ne.s32.totalorder %s40, %s56
      %p58 = scmp.eq.s32.totalorder %s18, 0
      %p59 = por %p57, %p58
      %s61 = sadd.s32 %s60, 1
      %p64 = scmp.eq.s32.totalorder %s12, 3
      %p65 = scmp.ne.s32.totalorder %s60, %s62
      %p66 = scmp.eq.s32.totalorder %s12, 0
      %p67 = por %p65, %p66
      %p68 = scmp.ne.s32.totalorder %s60, %s62
      %p69 = scmp.eq.s32.totalorder %s17, 3
      %p70 = por %p68, %p69
      %p71 = scmp.ne.s32.totalorder %s62, %s63
      %p72 = scmp.eq.s32.totalorder %s17, 0
      %p73 = por %p71, %p72
      %p74 = scmp.ne.s32.totalorder %s62, %s63
      %p75 = scmp.eq.s32.totalorder %s18, 3
      %p76 = por %p74, %p75
      %p78 = scmp.ne.s32.totalorder %s63, %s77
      %p79 = scmp.eq.s32.totalorder %s18, 0
      %p80 = por %p78, %p79
      %s82 = sadd.s32 %s81, 1
      %p85 = scmp.eq.s32.totalorder %s12, 3
      %p86 = scmp.ne.s32.totalorder %s81, %s83
      %p87 = scmp.eq.s32.totalorder %s12, 0
      %p88 = por %p86, %p87
      %p89 = scmp.ne.s32.totalorder %s81, %s83
      %p90 = scmp.eq.s32.totalorder %s17, 3
      %p91 = por %p89, %p90
      %p92 = scmp.ne.s32.totalorder %s83, %s84
      %p93 = scmp.eq.s32.totalorder %s17, 0
      %p94 = por %p92, %p93
      %p95 = scmp.ne.s32.totalorder %s83, %s84
      %p96 = scmp.eq.s32.totalorder %s18, 3
      %p97 = por %p95, %p96
      %p99 = scmp.ne.s32.totalorder %s84, %s98
      %p100 = scmp.eq.s32.totalorder %s18, 0
      %p101 = por %p99, %p100
      %s102 = ssub.s32 %s19, %s31
      %s103 = ssub.s32 %s20, %s27
      %s104 = sor.u32 %s102, %s103
      %p105 = scmp.eq.s32.totalorder %s104, 0
      %s107 = sadd.s32 %s106, 1
      %s108 = scalar_select %p105, %s106, %s107
      %p111 = pneg %p105
      %p112 = scmp.eq.s32.totalorder %s12, 3
      %p113 = por %p111, %p112
      %p114 = scmp.ne.s32.totalorder %s106, %s109
      %p115 = scmp.eq.s32.totalorder %s12, 0
      %p116 = por %p114, %p115
      %p117 = scmp.ne.s32.totalorder %s106, %s109
      %p118 = scmp.eq.s32.totalorder %s17, 3
      %p119 = por %p117, %p118
      %p120 = scmp.ne.s32.totalorder %s109, %s110
      %p121 = scmp.eq.s32.totalorder %s17, 0
      %p122 = por %p120, %p121
      %p123 = scmp.ne.s32.totalorder %s109, %s110
      %p124 = scmp.eq.s32.totalorder %s18, 3
      %p125 = por %p123, %p124
      %p127 = scmp.ne.s32.totalorder %s110, %s126
      %p128 = scmp.eq.s32.totalorder %s18, 0
      %p129 = por %p127, %p128
      %p130 = scmp.le.s32.totalorder 1, %s12
      %p131 = scmp.lt.s32.totalorder %s12, 5
      %p132 = pnand %p130, %p131
      %p133 = pneg %p132
      // Predicated region
      $region9: #{tpu_custom_call.1} parent=5 // pred_check
        _
      $region10: #{tpu_custom_call.1} parent=5 // pred_check_branch
        %135 = sbr.rel (%p132) target = $region12
      $region11: #{tpu_custom_call.1} parent=5 // pred_region
        %s136 = ssub.s32 %s12, 1
        // Predicated region
        $region13: #{tpu_custom_call.1} parent=11 // pred_check
          %p137 = pneg %p73
        $region14: #{tpu_custom_call.1} parent=11 // pred_check_branch
          %139 = sbr.rel (%p137) target = $region16
        $region15: #{tpu_custom_call.1} parent=11 // pred_region
          _
        $region16: #{tpu_custom_call.1} parent=11 // pred_fallthru
          _
        // Predicated region
        $region17: #{tpu_custom_call.1} parent=11 // pred_check
          %p140 = pneg %p94
        $region18: #{tpu_custom_call.1} parent=11 // pred_check_branch
          %142 = sbr.rel (%p140) target = $region20
        $region19: #{tpu_custom_call.1} parent=11 // pred_region
          _
        $region20: #{tpu_custom_call.1} parent=11 // pred_fallthru
          _
      $region12: #{tpu_custom_call.1} parent=5 // pred_fallthru
        _
      %p143 = scmp.lt.s32.totalorder %s12, 4
      // Predicated region
      $region21: #{tpu_custom_call.1} parent=5 // pred_check
        %p144 = pneg %p143
      $region22: #{tpu_custom_call.1} parent=5 // pred_check_branch
        %146 = sbr.rel (%p144) target = $region24
      $region23: #{tpu_custom_call.1} parent=5 // pred_region
        // Predicated region
        $region25: #{tpu_custom_call.1} parent=23 // pred_check
          %p147 = pneg %p46
        $region26: #{tpu_custom_call.1} parent=23 // pred_check_branch
          %149 = sbr.rel (%p147) target = $region28
        $region27: #{tpu_custom_call.1} parent=23 // pred_region
          %p150 = scmp.lt.s32.totalorder %s19, 1
          %s151 = scalar_select %p150, %s19, 1
          %p152 = scmp.lt.s32.totalorder %s20, 1
          %s153 = scalar_select %p152, %s20, 1
          %s154 = smul.addr %s153, 72
          %s155 = smul.addr %s151, 144
          %s156 = sadd.s32 %s154, %s155
          %s157 = smul.addr %s156, 8
          %s158 = scalar_lea.vmem %s0, %s157
        $region28: #{tpu_custom_call.1} parent=23 // pred_fallthru
          _
      $region24: #{tpu_custom_call.1} parent=5 // pred_fallthru
        _
      %p159 = scmp.le.s32.totalorder 1, %s12
      %p160 = scmp.lt.s32.totalorder %s12, 5
      %p161 = pnand %p159, %p160
      %p162 = pneg %p161
      // Predicated region
      $region29: #{tpu_custom_call.1} parent=5 // pred_check
        _
      $region30: #{tpu_custom_call.1} parent=5 // pred_check_branch
        %164 = sbr.rel (%p161) target = $region32
      $region31: #{tpu_custom_call.1} parent=5 // pred_region
        %s165 = ssub.s32 %s12, 1
        %p166 = scmp.lt.s32.totalorder %s21, 1
        %s167 = scalar_select %p166, %s21, 1
        %p168 = scmp.lt.s32.totalorder %s22, 1
        %s169 = scalar_select %p168, %s22, 1
        %s170 = smul.addr %s169, 72
        %s171 = smul.addr %s167, 144
        %s172 = sadd.s32 %s170, %s171
        %s173 = smul.addr %s172, 8
        %s174 = scalar_lea.vmem %s0, %s173
        %p175 = pneg %p52
        %p176 = pneg %p49
        %p177 = pneg %p73
        %p178 = pneg %p70
        %p179 = pneg %p94
        %p180 = pneg %p91
        %p181 = pneg %p122
        %p182 = pneg %p119
        %s183 = sand.u32 %s109, 1
        %s184 = scalar_lea.sflag [#allocation3], %s183
        %s185 = sand.u32 %s109, 1
        %s186 = smul.addr %s185, 16
        %s187 = scalar_lea.vmem [#allocation2], %s186
        %p188 = scmp.lt.s32.totalorder %s21, 1
        %s189 = scalar_select %p188, %s21, 1
        %p190 = scmp.lt.s32.totalorder %s22, 1
        %s191 = scalar_select %p190, %s22, 1
        %s192 = smul.addr %s191, 72
        %s193 = smul.addr %s189, 144
        %s194 = sadd.s32 %s192, %s193
        %s195 = smul.addr %s194, 8
        %s196 = scalar_lea.vmem %s0, %s195
        %v198 = vld [vmem:[%s196] sm:$0xff]
        %v199 = vld [vmem:[%s196 + $0x8] sm:$0xff]
        %v200 = vld [vmem:[%s196 + $0x10] sm:$0x1]
        %v201 = vld [vmem:[%s196 + $0x18] sm:$0xff]
        %v202 = vld [vmem:[%s196 + $0x20] sm:$0xff]
        %v203 = vld [vmem:[%s196 + $0x28] sm:$0x1]
        %v204 = vld [vmem:[%s196 + $0x30] sm:$0xff]
        %v205 = vld [vmem:[%s196 + $0x38] sm:$0xff]
        %v206 = vld [vmem:[%s196 + $0x40] sm:$0x1]
        %v207 = vld [vmem:[%s196 + $0x48] sm:$0xff]
        %v208 = vld [vmem:[%s196 + $0x50] sm:$0xff]
        %v209 = vld [vmem:[%s196 + $0x58] sm:$0x1]
        %v210 = vld [vmem:[%s196 + $0x60] sm:$0xff]
        %v211 = vld [vmem:[%s196 + $0x68] sm:$0xff]
        %v212 = vld [vmem:[%s196 + $0x70] sm:$0x1]
        %v213 = vld [vmem:[%s196 + $0x78] sm:$0xff]
        %v214 = vld [vmem:[%s196 + $0x80] sm:$0xff]
        %v215 = vld [vmem:[%s196 + $0x88] sm:$0x1]
        %v216 = vld [vmem:[%s196 + $0x90] sm:$0xff]
        %v217 = vld [vmem:[%s196 + $0x98] sm:$0xff]
        %v218 = vld [vmem:[%s196 + $0xa8] sm:$0xff]
        %v219 = vld [vmem:[%s196 + $0xb0] sm:$0xff]
        %v220 = vld [vmem:[%s196 + $0xc0] sm:$0xff]
        %v221 = vld [vmem:[%s196 + $0xc8] sm:$0xff]
        %v222 = vld [vmem:[%s196 + $0xd8] sm:$0xff]
        %v223 = vld [vmem:[%s196 + $0xe0] sm:$0xff]
        %v224 = vld [vmem:[%s196 + $0xf0] sm:$0xff]
        %v225 = vld [vmem:[%s196 + $0xf8] sm:$0xff]
        %v226 = vld [vmem:[%s196 + $0x108] sm:$0xff]
        %v227 = vld [vmem:[%s196 + $0x110] sm:$0xff]
        %v228 = vld [vmem:[%s196 + $0x120] sm:$0xff]
        %v229 = vld [vmem:[%s196 + $0x128] sm:$0xff]
        %v230 = vld [vmem:[%s196 + $0x130] sm:$0x1]
        %v231 = vld [vmem:[%s196 + $0x138] sm:$0xff]
        %v232 = vld [vmem:[%s196 + $0x140] sm:$0xff]
        %v233 = vld [vmem:[%s196 + $0x148] sm:$0x1]
        %v234 = vld [vmem:[%s196 + $0x150] sm:$0xff]
        %v235 = vld [vmem:[%s196 + $0x158] sm:$0xff]
        %v236 = vld [vmem:[%s196 + $0x160] sm:$0x1]
        %v237 = vld [vmem:[%s196 + $0x168] sm:$0xff]
        %v238 = vld [vmem:[%s196 + $0x170] sm:$0xff]
        %v239 = vld [vmem:[%s196 + $0x178] sm:$0x1]
        %v240 = vld [vmem:[%s196 + $0x180] sm:$0xff]
        %v241 = vld [vmem:[%s196 + $0x188] sm:$0xff]
        %v242 = vld [vmem:[%s196 + $0x190] sm:$0x1]
        %v243 = vld [vmem:[%s196 + $0x1b0] sm:$0xff]
        %v244 = vld [vmem:[%s196 + $0x1b8] sm:$0xff]
        %v245 = vld [vmem:[%s196 + $0x1c8] sm:$0xff]
        %v246 = vld [vmem:[%s196 + $0x1d0] sm:$0xff]
        %v247 = vld [vmem:[%s196 + $0x1e0] sm:$0xff]
        %v248 = vld [vmem:[%s196 + $0x1e8] sm:$0xff]
        %v249 = vld [vmem:[%s196 + $0x1f8] sm:$0xff]
        %v250 = vld [vmem:[%s196 + $0x200] sm:$0xff]
        %v251 = vld [vmem:[%s196 + $0x210] sm:$0xff]
        %v252 = vld [vmem:[%s196 + $0x218] sm:$0xff]
        %263 = vrot.lane.b32.xlu0 %v216, 24
        %v264 = vpop.permute.xlu0 %263
        %265 = vrot.lane.b32.xlu0 %v217, 24
        %v266 = vpop.permute.xlu0 %265
        %267 = vrot.lane.b32.xlu0 %v218, 24
        %v268 = vpop.permute.xlu0 %267
        %269 = vrot.lane.b32.xlu0 %v219, 24
        %v270 = vpop.permute.xlu0 %269
        %271 = vrot.lane.b32.xlu0 %v220, 24
        %v272 = vpop.permute.xlu0 %271
        %273 = vrot.lane.b32.xlu0 %v221, 24
        %v274 = vpop.permute.xlu0 %273
        %275 = vrot.lane.b32.xlu0 %v222, 24
        %v276 = vpop.permute.xlu0 %275
        %277 = vrot.lane.b32.xlu0 %v223, 24
        %v278 = vpop.permute.xlu0 %277
        %279 = vrot.lane.b32.xlu0 %v224, 24
        %v280 = vpop.permute.xlu0 %279
        %281 = vrot.lane.b32.xlu0 %v225, 24
        %v282 = vpop.permute.xlu0 %281
        %vm308 = vcmask 1046528
        %v309 = vrot.slane %v198, 1
        %v310 = vrot.slane %v199, 1
        %v311 = vsel %vm308, %v309, %v310
        %v312 = vrot.slane %v200, 1
        %v313 = vsel %vm308, %v310, %v312
        %v314 = vrot.slane %v201, 1
        %v315 = vrot.slane %v202, 1
        %v316 = vsel %vm308, %v314, %v315
        %v317 = vrot.slane %v203, 1
        %v318 = vsel %vm308, %v315, %v317
        %v319 = vrot.slane %v204, 1
        %v320 = vrot.slane %v205, 1
        %v321 = vsel %vm308, %v319, %v320
        %v322 = vrot.slane %v206, 1
        %v323 = vsel %vm308, %v320, %v322
        %v324 = vrot.slane %v207, 1
        %v325 = vrot.slane %v208, 1
        %v326 = vsel %vm308, %v324, %v325
        %v327 = vrot.slane %v209, 1
        %v328 = vsel %vm308, %v325, %v327
        %v329 = vrot.slane %v210, 1
        %v330 = vrot.slane %v211, 1
        %v331 = vsel %vm308, %v329, %v330
        %v332 = vrot.slane %v212, 1
        %v333 = vsel %vm308, %v330, %v332
        %334 = vrot.lane.b32.xlu0 %v311, 48
        %v335 = vpop.permute.xlu0 %334
        %336 = vrot.lane.b32.xlu0 %v313, 48
        %v337 = vpop.permute.xlu0 %336
        %338 = vrot.lane.b32.xlu0 %v316, 48
        %v339 = vpop.permute.xlu0 %338
        %340 = vrot.lane.b32.xlu0 %v318, 48
        %v341 = vpop.permute.xlu0 %340
        %342 = vrot.lane.b32.xlu0 %v321, 48
        %v343 = vpop.permute.xlu0 %342
        %344 = vrot.lane.b32.xlu0 %v323, 48
        %v345 = vpop.permute.xlu0 %344
        %346 = vrot.lane.b32.xlu0 %v326, 48
        %v347 = vpop.permute.xlu0 %346
        %348 = vrot.lane.b32.xlu0 %v328, 48
        %v349 = vpop.permute.xlu0 %348
        %350 = vrot.lane.b32.xlu0 %v331, 48
        %v351 = vpop.permute.xlu0 %350
        %352 = vrot.lane.b32.xlu0 %v333, 48
        %v353 = vpop.permute.xlu0 %352
        %374 = vrot.lane.b32.xlu0 %v228, 72
        %v375 = vpop.permute.xlu0 %374
        %376 = vrot.lane.b32.xlu0 %v229, 72
        %v377 = vpop.permute.xlu0 %376
        %378 = vrot.lane.b32.xlu0 %v231, 72
        %v379 = vpop.permute.xlu0 %378
        %380 = vrot.lane.b32.xlu0 %v232, 72
        %v381 = vpop.permute.xlu0 %380
        %382 = vrot.lane.b32.xlu0 %v234, 72
        %v383 = vpop.permute.xlu0 %382
        %384 = vrot.lane.b32.xlu0 %v235, 72
        %v385 = vpop.permute.xlu0 %384
        %386 = vrot.lane.b32.xlu0 %v237, 72
        %v387 = vpop.permute.xlu0 %386
        %388 = vrot.lane.b32.xlu0 %v238, 72
        %v389 = vpop.permute.xlu0 %388
        %390 = vrot.lane.b32.xlu0 %v240, 72
        %v391 = vpop.permute.xlu0 %390
        %392 = vrot.lane.b32.xlu0 %v241, 72
        %v393 = vpop.permute.xlu0 %392
        %414 = vrot.lane.b32.xlu0 %v243, 96
        %v415 = vpop.permute.xlu0 %414
        %416 = vrot.lane.b32.xlu0 %v244, 96
        %v417 = vpop.permute.xlu0 %416
        %418 = vrot.lane.b32.xlu0 %v245, 96
        %v419 = vpop.permute.xlu0 %418
        %420 = vrot.lane.b32.xlu0 %v246, 96
        %v421 = vpop.permute.xlu0 %420
        %422 = vrot.lane.b32.xlu0 %v247, 96
        %v423 = vpop.permute.xlu0 %422
        %424 = vrot.lane.b32.xlu0 %v248, 96
        %v425 = vpop.permute.xlu0 %424
        %426 = vrot.lane.b32.xlu0 %v249, 96
        %v427 = vpop.permute.xlu0 %426
        %428 = vrot.lane.b32.xlu0 %v250, 96
        %v429 = vpop.permute.xlu0 %428
        %430 = vrot.lane.b32.xlu0 %v251, 96
        %v431 = vpop.permute.xlu0 %430
        %432 = vrot.lane.b32.xlu0 %v252, 96
        %v433 = vpop.permute.xlu0 %432
        %v449 = vrot.slane %v228, 1
        %v450 = vrot.slane %v229, 1
        %v451 = vsel %vm308, %v449, %v450
        %v452 = vrot.slane %v230, 1
        %v453 = vsel %vm308, %v450, %v452
        %v454 = vrot.slane %v231, 1
        %v455 = vrot.slane %v232, 1
        %v456 = vsel %vm308, %v454, %v455
        %v457 = vrot.slane %v233, 1
        %v458 = vsel %vm308, %v455, %v457
        %v459 = vrot.slane %v234, 1
        %v460 = vrot.slane %v235, 1
        %v461 = vsel %vm308, %v459, %v460
        %v462 = vrot.slane %v236, 1
        %v463 = vsel %vm308, %v460, %v462
        %v464 = vrot.slane %v237, 1
        %v465 = vrot.slane %v238, 1
        %v466 = vsel %vm308, %v464, %v465
        %v467 = vrot.slane %v239, 1
        %v468 = vsel %vm308, %v465, %v467
        %v469 = vrot.slane %v240, 1
        %v470 = vrot.slane %v241, 1
        %v471 = vsel %vm308, %v469, %v470
        %v472 = vrot.slane %v242, 1
        %v473 = vsel %vm308, %v470, %v472
        %474 = vrot.lane.b32.xlu0 %v451, 120
        %v475 = vpop.permute.xlu0 %474
        %476 = vrot.lane.b32.xlu0 %v453, 120
        %v477 = vpop.permute.xlu0 %476
        %478 = vrot.lane.b32.xlu0 %v456, 120
        %v479 = vpop.permute.xlu0 %478
        %480 = vrot.lane.b32.xlu0 %v458, 120
        %v481 = vpop.permute.xlu0 %480
        %482 = vrot.lane.b32.xlu0 %v461, 120
        %v483 = vpop.permute.xlu0 %482
        %484 = vrot.lane.b32.xlu0 %v463, 120
        %v485 = vpop.permute.xlu0 %484
        %486 = vrot.lane.b32.xlu0 %v466, 120
        %v487 = vpop.permute.xlu0 %486
        %488 = vrot.lane.b32.xlu0 %v468, 120
        %v489 = vpop.permute.xlu0 %488
        %490 = vrot.lane.b32.xlu0 %v471, 120
        %v491 = vpop.permute.xlu0 %490
        %492 = vrot.lane.b32.xlu0 %v473, 120
        %v493 = vpop.permute.xlu0 %492
        %506 = vrot.lane.b32.xlu0 %v201, 16
        %v507 = vpop.permute.xlu0 %506
        %508 = vrot.lane.b32.xlu0 %v202, 16
        %v509 = vpop.permute.xlu0 %508
        %510 = vrot.lane.b32.xlu0 %v204, 16
        %v511 = vpop.permute.xlu0 %510
        %512 = vrot.lane.b32.xlu0 %v205, 16
        %v513 = vpop.permute.xlu0 %512
        %514 = vrot.lane.b32.xlu0 %v207, 16
        %v515 = vpop.permute.xlu0 %514
        %516 = vrot.lane.b32.xlu0 %v208, 16
        %v517 = vpop.permute.xlu0 %516
        %518 = vrot.lane.b32.xlu0 %v210, 16
        %v519 = vpop.permute.xlu0 %518
        %520 = vrot.lane.b32.xlu0 %v211, 16
        %v521 = vpop.permute.xlu0 %520
        %522 = vrot.lane.b32.xlu0 %v213, 16
        %v523 = vpop.permute.xlu0 %522
        %524 = vrot.lane.b32.xlu0 %v214, 16
        %v525 = vpop.permute.xlu0 %524
        %538 = vrot.lane.b32.xlu0 %v218, 40
        %v539 = vpop.permute.xlu0 %538
        %540 = vrot.lane.b32.xlu0 %v219, 40
        %v541 = vpop.permute.xlu0 %540
        %542 = vrot.lane.b32.xlu0 %v220, 40
        %v543 = vpop.permute.xlu0 %542
        %544 = vrot.lane.b32.xlu0 %v221, 40
        %v545 = vpop.permute.xlu0 %544
        %546 = vrot.lane.b32.xlu0 %v222, 40
        %v547 = vpop.permute.xlu0 %546
        %548 = vrot.lane.b32.xlu0 %v223, 40
        %v549 = vpop.permute.xlu0 %548
        %550 = vrot.lane.b32.xlu0 %v224, 40
        %v551 = vpop.permute.xlu0 %550
        %552 = vrot.lane.b32.xlu0 %v225, 40
        %v553 = vpop.permute.xlu0 %552
        %554 = vrot.lane.b32.xlu0 %v226, 40
        %v555 = vpop.permute.xlu0 %554
        %556 = vrot.lane.b32.xlu0 %v227, 40
        %v557 = vpop.permute.xlu0 %556
        %v569 = vrot.slane %v213, 1
        %v570 = vrot.slane %v214, 1
        %v571 = vsel %vm308, %v569, %v570
        %v572 = vrot.slane %v215, 1
        %v573 = vsel %vm308, %v570, %v572
        %574 = vrot.lane.b32.xlu0 %v316, 64
        %v575 = vpop.permute.xlu0 %574
        %576 = vrot.lane.b32.xlu0 %v318, 64
        %v577 = vpop.permute.xlu0 %576
        %578 = vrot.lane.b32.xlu0 %v321, 64
        %v579 = vpop.permute.xlu0 %578
        %580 = vrot.lane.b32.xlu0 %v323, 64
        %v581 = vpop.permute.xlu0 %580
        %582 = vrot.lane.b32.xlu0 %v326, 64
        %v583 = vpop.permute.xlu0 %582
        %584 = vrot.lane.b32.xlu0 %v328, 64
        %v585 = vpop.permute.xlu0 %584
        %586 = vrot.lane.b32.xlu0 %v331, 64
        %v587 = vpop.permute.xlu0 %586
        %588 = vrot.lane.b32.xlu0 %v333, 64
        %v589 = vpop.permute.xlu0 %588
        %590 = vrot.lane.b32.xlu0 %v571, 64
        %v591 = vpop.permute.xlu0 %590
        %592 = vrot.lane.b32.xlu0 %v573, 64
        %v593 = vpop.permute.xlu0 %592
        %vm604 = vcmask 195584
        %v605 = vsel %vm604, %v198, %v264
        %v606 = vsel %vm604, %v199, %v266
        %v607 = vsel %vm604, %v201, %v268
        %v608 = vsel %vm604, %v202, %v270
        %v609 = vsel %vm604, %v204, %v272
        %v610 = vsel %vm604, %v205, %v274
        %v611 = vsel %vm604, %v207, %v276
        %v612 = vsel %vm604, %v208, %v278
        %v613 = vsel %vm604, %v210, %v280
        %v614 = vsel %vm604, %v211, %v282
        %vm615 = vcmask 392192
        %v616 = vsel %vm615, %v605, %v335
        %v617 = vsel %vm615, %v606, %v337
        %v618 = vsel %vm615, %v607, %v339
        %v619 = vsel %vm615, %v608, %v341
        %v620 = vsel %vm615, %v609, %v343
        %v621 = vsel %vm615, %v610, %v345
        %v622 = vsel %vm615, %v611, %v347
        %v623 = vsel %vm615, %v612, %v349
        %v624 = vsel %vm615, %v613, %v351
        %v625 = vsel %vm615, %v614, %v353
        %vm626 = vcmask 588800
        %v627 = vsel %vm626, %v616, %v375
        %v628 = vsel %vm626, %v617, %v377
        %v629 = vsel %vm626, %v618, %v379
        %v630 = vsel %vm626, %v619, %v381
        %v631 = vsel %vm626, %v620, %v383
        %v632 = vsel %vm626, %v621, %v385
        %v633 = vsel %vm626, %v622, %v387
        %v634 = vsel %vm626, %v623, %v389
        %v635 = vsel %vm626, %v624, %v391
        %v636 = vsel %vm626, %v625, %v393
        %vm637 = vcmask 785408
        %v638 = vsel %vm637, %v627, %v415
        %v639 = vsel %vm637, %v628, %v417
        %v640 = vsel %vm637, %v629, %v419
        %v641 = vsel %vm637, %v630, %v421
        %v642 = vsel %vm637, %v631, %v423
        %v643 = vsel %vm637, %v632, %v425
        %v644 = vsel %vm637, %v633, %v427
        %v645 = vsel %vm637, %v634, %v429
        %v646 = vsel %vm637, %v635, %v431
        %v647 = vsel %vm637, %v636, %v433
        %vm648 = vcmask 982016
        %v649 = vsel %vm648, %v638, %v475
        %v650 = vsel %vm648, %v639, %v477
        %v651 = vsel %vm648, %v640, %v479
        %v652 = vsel %vm648, %v641, %v481
        %v653 = vsel %vm648, %v642, %v483
        %v654 = vsel %vm648, %v643, %v485
        %v655 = vsel %vm648, %v644, %v487
        %v656 = vsel %vm648, %v645, %v489
        %v657 = vsel %vm648, %v646, %v491
        %v658 = vsel %vm648, %v647, %v493
        %vm659 = vcmask 130048
        %v660 = vsel %vm659, %v475, %v507
        %v661 = vsel %vm659, %v477, %v509
        %v662 = vsel %vm659, %v479, %v511
        %v663 = vsel %vm659, %v481, %v513
        %v664 = vsel %vm659, %v483, %v515
        %v665 = vsel %vm659, %v485, %v517
        %v666 = vsel %vm659, %v487, %v519
        %v667 = vsel %vm659, %v489, %v521
        %v668 = vsel %vm659, %v491, %v523
        %v669 = vsel %vm659, %v493, %v525
        %vm670 = vcmask 326656
        %v671 = vsel %vm670, %v660, %v539
        %v672 = vsel %vm670, %v661, %v541
        %v673 = vsel %vm670, %v662, %v543
        %v674 = vsel %vm670, %v663, %v545
        %v675 = vsel %vm670, %v664, %v547
        %v676 = vsel %vm670, %v665, %v549
        %v677 = vsel %vm670, %v666, %v551
        %v678 = vsel %vm670, %v667, %v553
        %v679 = vsel %vm670, %v668, %v555
        %v680 = vsel %vm670, %v669, %v557
        %vm681 = vcmask 523264
        %v682 = vsel %vm681, %v671, %v575
        %v683 = vsel %vm681, %v672, %v577
        %v684 = vsel %vm681, %v673, %v579
        %v685 = vsel %vm681, %v674, %v581
        %v686 = vsel %vm681, %v675, %v583
        %v687 = vsel %vm681, %v676, %v585
        %v688 = vsel %vm681, %v677, %v587
        %v689 = vsel %vm681, %v678, %v589
        %v690 = vsel %vm681, %v679, %v591
        %v691 = vsel %vm681, %v680, %v593
        %v692 = vpack.c.bf16 %v650, %v649
        %v693 = vpack.c.bf16 %v683, %v682
        %v694 = vpack.c.bf16 %v652, %v651
        %v695 = vpack.c.bf16 %v685, %v684
        %v696 = vpack.c.bf16 %v654, %v653
        %v697 = vpack.c.bf16 %v687, %v686
        %v698 = vpack.c.bf16 %v656, %v655
        %v699 = vpack.c.bf16 %v689, %v688
        %v700 = vpack.c.bf16 %v658, %v657
        %v701 = vpack.c.bf16 %v691, %v690
        %v702 = vld [vmem:[%s1] sm:$0xf]
        %v703 = vld [vmem:[%s1 + $0x4] sm:$0xf]
        %v704 = vld [vmem:[%s1 + $0x8] sm:$0xf]
        %v705 = vld [vmem:[%s1 + $0xc] sm:$0xf]
        %v706 = vld [vmem:[%s1 + $0x10] sm:$0xf]
        %v707 = vld [vmem:[%s1 + $0x14] sm:$0xf]
        %v708 = vld [vmem:[%s1 + $0x18] sm:$0xf]
        %v709 = vld [vmem:[%s1 + $0x1c] sm:$0xf]
        %v710 = vld [vmem:[%s1 + $0x20] sm:$0xf]
        %v711 = vld [vmem:[%s1 + $0x24] sm:$0xf]
        %v712 = vld [vmem:[%s1 + $0x28] sm:$0xf]
        %v713 = vld [vmem:[%s1 + $0x2c] sm:$0xf]
        %v714 = vld [vmem:[%s1 + $0x30] sm:$0xf]
        %v715 = vld [vmem:[%s1 + $0x34] sm:$0xf]
        %v716 = vld [vmem:[%s1 + $0x38] sm:$0xf]
        %v717 = vld [vmem:[%s1 + $0x3c] sm:$0xf]
        %v718 = vld [vmem:[%s1 + $0x40] sm:$0xf]
        %v719 = vld [vmem:[%s1 + $0x44] sm:$0xf]
        %v720 = vld [vmem:[%s1 + $0x48] sm:$0xf]
        %v721 = vld [vmem:[%s1 + $0x4c] sm:$0xf]
        %v722 = vld [vmem:[%s1 + $0x50] sm:$0xf]
        %v723 = vld [vmem:[%s1 + $0x54] sm:$0xf]
        %v724 = vld [vmem:[%s1 + $0x58] sm:$0xf]
        %v725 = vld [vmem:[%s1 + $0x5c] sm:$0xf]
        %v726 = vld [vmem:[%s1 + $0x60] sm:$0xf]
        %v727 = vld [vmem:[%s1 + $0x64] sm:$0xf]
        %v728 = vld [vmem:[%s1 + $0x68] sm:$0xf]
        %v729 = vld [vmem:[%s2] sm:$0x1]
        %v731 = vlaneseq
        %v732 = vshrl.u32 %v731, 7
        %v733 = vsub.s32 0, %v732
        %v734 = vrot.slane %v729, %v733
        %v763 = vunpack.c.l.b16 %v702
        %v764 = vunpack.c.l.b16 %v703
        %v765 = vunpack.c.l.b16 %v704
        %v766 = vunpack.c.l.b16 %v705
        %v767 = vunpack.c.l.b16 %v706
        %v768 = vunpack.c.l.b16 %v707
        %v769 = vunpack.c.l.b16 %v708
        %v770 = vunpack.c.l.b16 %v709
        %v771 = vunpack.c.l.b16 %v710
        %v772 = vunpack.c.l.b16 %v711
        %v773 = vunpack.c.l.b16 %v712
        %v774 = vunpack.c.l.b16 %v713
        %v775 = vunpack.c.l.b16 %v714
        %v776 = vunpack.c.l.b16 %v715
        %v777 = vunpack.c.l.b16 %v716
        %v778 = vunpack.c.l.b16 %v717
        %v779 = vunpack.c.l.b16 %v718
        %v780 = vunpack.c.l.b16 %v719
        %v781 = vunpack.c.l.b16 %v720
        %v782 = vunpack.c.l.b16 %v721
        %v783 = vunpack.c.l.b16 %v722
        %v784 = vunpack.c.l.b16 %v723
        %v785 = vunpack.c.l.b16 %v724
        %v786 = vunpack.c.l.b16 %v725
        %v787 = vunpack.c.l.b16 %v726
        %v788 = vunpack.c.l.b16 %v727
        %v789 = vunpack.c.l.b16 %v728
        %v790 = vpack.c.b16 %v764, %v763
        %v791 = vpack.c.b16 %v766, %v765
        %v792 = vpack.c.b16 %v768, %v767
        %v793 = vpack.c.b16 %v770, %v769
        %v794 = vpack.c.b16 %v772, %v771
        %v795 = vpack.c.b16 %v774, %v773
        %v796 = vpack.c.b16 %v776, %v775
        %v797 = vpack.c.b16 %v778, %v777
        %v798 = vpack.c.b16 %v780, %v779
        %v799 = vpack.c.b16 %v782, %v781
        %v800 = vpack.c.b16 %v784, %v783
        %v801 = vpack.c.b16 %v786, %v785
        %v802 = vpack.c.b16 %v788, %v787
        %v803 = vpack.c.b16 %v789, %v789
        %vm817 = vcmask 719872
        %v819 = vsel %vm817, %v693, 0
        %v822 = vsel %vm817, %v695, 0
        %v825 = vsel %vm817, %v697, 0
        %v828 = vsel %vm817, %v699, 0
        %v831 = vsel %vm817, %v701, 0
        %vm833 = vcmask 1043456
        %v835 = vsel %vm833, %v803, 0
        %837 = vmatprep.subr.bf16.mxu0 0
        %838 = vmatpush1.bf16.msra.mxu0 %v790
        %839 = vmatprep.subr.bf16.mxu0 0
        %840 = vmatpush1.bf16.msra.mxu0 %v791
        %841 = vmatprep.subr.bf16.mxu0 0
        %842 = vmatpush1.bf16.msra.mxu0 %v792
        %843 = vmatprep.subr.bf16.mxu0 0
        %844 = vmatpush1.bf16.msra.mxu0 %v793
        %845 = vmatprep.subr.bf16.mxu0 0
        %846 = vmatpush1.bf16.msra.mxu0 %v794
        %847 = vmatprep.subr.bf16.mxu0 0
        %848 = vmatpush1.bf16.msra.mxu0 %v795
        %849 = vmatprep.subr.bf16.mxu0 0
        %850 = vmatpush1.bf16.msra.mxu0 %v796
        %851 = vmatprep.subr.bf16.mxu0 0
        %852 = vmatpush1.bf16.msra.mxu0 %v797
        %853 = vmatprep.subr.bf16.mxu0 0
        %854 = vmatpush1.bf16.msra.mxu0 %v798
        %855 = vmatprep.subr.bf16.mxu0 0
        %856 = vmatpush1.bf16.msra.mxu0 %v799
        %857 = vmatprep.subr.bf16.mxu0 0
        %858 = vmatpush1.bf16.msra.mxu0 %v800
        %859 = vmatprep.subr.bf16.mxu0 0
        %860 = vmatpush1.bf16.msra.mxu0 %v801
        %861 = vmatprep.subr.bf16.mxu0 0
        %862 = vmatpush1.bf16.msra.mxu0 %v802
        %863 = vmatprep.subr.bf16.mxu0 0
        %864 = vmatpush1.bf16.msra.mxu0 %v835
        %865 = vmatprep.subr.bf16.mxu0 0
        %866 = vmatpush1.bf16.msra.mxu0 0
        %867 = vmatprep.subr.bf16.mxu0 0
        %868 = vmatpush1.bf16.msra.mxu0 0
        %869 = vmatprep.mubr.bf16.mxu0 %v819
        %870 = vmatmul.mubr.bf16.gmra.mrb[0].mxu0 %v692
        %v871 = vpop.f32.mrb[0].mxu0
        %v872 = vadd.f32 %v734, %v871
        %v873 = vpop.f32.mrb[0].mxu0
        %v874 = vpop.f32.mrb[0].mxu0
        %v875 = vadd.f32 %v734, %v874
        %v876 = vpop.f32.mrb[0].mxu0
        %877 = vmatprep.mubr.bf16.mxu0 %v822
        %878 = vmatmul.mubr.bf16.gmra.mrb[0].mxu0 %v694
        %v879 = vpop.f32.mrb[0].mxu0
        %v880 = vadd.f32 %v734, %v879
        %v881 = vpop.f32.mrb[0].mxu0
        %v882 = vpop.f32.mrb[0].mxu0
        %v883 = vadd.f32 %v734, %v882
        %v884 = vpop.f32.mrb[0].mxu0
        %885 = vmatprep.mubr.bf16.mxu0 %v825
        %886 = vmatmul.mubr.bf16.gmra.mrb[0].mxu0 %v696
        %v887 = vpop.f32.mrb[0].mxu0
        %v888 = vadd.f32 %v734, %v887
        %v889 = vpop.f32.mrb[0].mxu0
        %v890 = vpop.f32.mrb[0].mxu0
        %v891 = vadd.f32 %v734, %v890
        %v892 = vpop.f32.mrb[0].mxu0
        %893 = vmatprep.mubr.bf16.mxu0 %v828
        %894 = vmatmul.mubr.bf16.gmra.mrb[0].mxu0 %v698
        %v895 = vpop.f32.mrb[0].mxu0
        %v896 = vadd.f32 %v734, %v895
        %v897 = vpop.f32.mrb[0].mxu0
        %v898 = vpop.f32.mrb[0].mxu0
        %v899 = vadd.f32 %v734, %v898
        %v900 = vpop.f32.mrb[0].mxu0
        %901 = vmatprep.mubr.bf16.mxu0 %v831
        %902 = vmatmul.mubr.bf16.gmra.mrb[0].mxu0 %v700
        %v903 = vpop.f32.mrb[0].mxu0
        %v904 = vadd.f32 %v734, %v903
        %v905 = vpop.f32.mrb[0].mxu0
        %v906 = vpop.f32.mrb[0].mxu0
        %v907 = vadd.f32 %v734, %v906
        %v908 = vpop.f32.mrb[0].mxu0
        %909 = vdwg.mxu0
        %v910 = vmax.f32 %v872, 0.0
        %v911 = vmax.f32 %v875, 0.0
        %v912 = vmax.f32 %v880, 0.0
        %v913 = vmax.f32 %v883, 0.0
        %v914 = vmax.f32 %v888, 0.0
        %v915 = vmax.f32 %v891, 0.0
        %v916 = vmax.f32 %v896, 0.0
        %v917 = vmax.f32 %v899, 0.0
        %v918 = vmax.f32 %v904, 0.0
        %v919 = vmax.f32 %v907, 0.0
        %p920 = scmp.gt.s32.totalorder %s22, 0
        %s921 = scalar_select %p920, 1, 0
        %v922 = vstv %s921
        %vm923 = vcmp.eq.s32.totalorder %v922, 1
        %v924 = vsel %vm923, 1, 0
        %vm925 = vcmp.eq.s32.totalorder %v924, 1
        %v926 = vsel %vm925, %v910, 0.0
        %v927 = vsel %vm925, %v911, 0.0
        %v928 = vsel 1, %v912, 0.0
        %v929 = vsel 1, %v913, 0.0
        %v930 = vsel 1, %v914, 0.0
        %v931 = vsel 1, %v915, 0.0
        %v932 = vsel 1, %v916, 0.0
        %v933 = vsel 1, %v917, 0.0
        %v934 = vsel 1, %v918, 0.0
        %v935 = vsel 1, %v919, 0.0
        %v936 = vmax.f32 %v926, %v928
        %v937 = vmax.f32 %v927, %v929
        %v938 = vmax.f32 %v930, %v932
        %v939 = vmax.f32 %v931, %v933
        %v940 = vmax.f32 %v936, %v930
        %v941 = vmax.f32 %v937, %v931
        %v942 = vmax.f32 %v938, %v934
        %v943 = vmax.f32 %v939, %v935
        %vm948 = vcmask 1040384
        %v949 = vrot.slane %v940, 7
        %v950 = vrot.slane %v941, 7
        %v951 = vsel %vm948, %v949, %v950
        %v952 = vrot.slane %v942, 7
        %v953 = vrot.slane %v943, 7
        %v954 = vsel %vm948, %v952, %v953
        %v959 = vsel %vm948, 0.0, %v949
        %v960 = vsel %vm948, 0.0, %v952
        %v961 = vrot.slane %v940, 1
        %v962 = vrot.slane %v941, 1
        %v963 = vsel %vm308, %v961, %v962
        %v964 = vrot.slane %v942, 1
        %v965 = vrot.slane %v943, 1
        %v966 = vsel %vm308, %v964, %v965
        %v971 = vsel %vm308, %v962, 0.0
        %v972 = vsel %vm308, %v965, 0.0
        %v973 = vmax.f32 %v940, %v959
        %v974 = vmax.f32 %v941, %v951
        %v975 = vmax.f32 %v942, %v960
        %v976 = vmax.f32 %v943, %v954
        %v977 = vmax.f32 %v973, %v963
        %v978 = vmax.f32 %v974, %v971
        %v979 = vmax.f32 %v975, %v966
        %v980 = vmax.f32 %v976, %v972
        %v981 = vlaneseq
        %v982 = vshrl.u32 %v981, 7
        %v983 = vlaneseq
        %v984 = vand.u32 %v983, 127
        %v985 = vmul.u32 %v982, 2
        %vm986 = vcmp.eq.s32.totalorder %v984, %v985
        %v987 = vsel %vm986, 1, 0
        %v988 = vcvt.s32.f32 %v987
        %v989 = vpack.c.bf16 %v988, %v988
        %v990 = vpack.c.bf16 %v978, %v977
        %v991 = vpack.c.bf16 %v980, %v979
        %v993 = vsel %vm659, %v989, 0
        %995 = vmatprep.subr.bf16.mxu0 0
        %996 = vmatpush1.bf16.msra.mxu0 %v990
        %997 = vmatprep.subr.bf16.mxu0 0
        %998 = vmatpush1.bf16.msra.mxu0 0
        %999 = vmatprep.subr.bf16.mxu0 0
        %1000 = vmatpush1.bf16.msra.mxu0 0
        %1001 = vmatprep.subr.bf16.mxu0 0
        %1002 = vmatpush1.bf16.msra.mxu0 0
        %1003 = vmatprep.subr.bf16.mxu0 0
        %1004 = vmatpush1.bf16.msra.mxu0 0
        %1005 = vmatprep.subr.bf16.mxu0 0
        %1006 = vmatpush1.bf16.msra.mxu0 0
        %1007 = vmatprep.subr.bf16.mxu0 0
        %1008 = vmatpush1.bf16.msra.mxu0 0
        %1009 = vmatprep.subr.bf16.mxu0 0
        %1010 = vmatpush1.bf16.msra.mxu0 0
        %1011 = vmatprep.subr.bf16.mxu0 0
        %1012 = vmatpush1.bf16.msra.mxu0 0
        %1013 = vmatprep.subr.bf16.mxu0 0
        %1014 = vmatpush1.bf16.msra.mxu0 0
        %1015 = vmatprep.subr.bf16.mxu0 0
        %1016 = vmatpush1.bf16.msra.mxu0 0
        %1017 = vmatprep.subr.bf16.mxu0 0
        %1018 = vmatpush1.bf16.msra.mxu0 0
        %1019 = vmatprep.subr.bf16.mxu0 0
        %1020 = vmatpush1.bf16.msra.mxu0 0
        %1021 = vmatprep.subr.bf16.mxu0 0
        %1022 = vmatpush1.bf16.msra.mxu0 0
        %1023 = vmatprep.subr.bf16.mxu0 0
        %1024 = vmatpush1.bf16.msra.mxu0 0
        %1025 = vmatprep.subr.bf16.mxu0 0
        %1026 = vmatpush1.bf16.msra.mxu0 0
        %1027 = vmatprep.mubr.bf16.mxu0 0
        %1028 = vmatmul.mubr.bf16.gmra.mrb[0].mxu0 %v993
        %v1029 = vpop.f32.mrb[0].mxu0
        %v1030 = vadd.f32 0.0, %v1029
        %v1031 = vpop.f32.mrb[0].mxu0
        %v1032 = vpop.f32.mrb[0].mxu0
        %v1033 = vpop.f32.mrb[0].mxu0
        %1034 = vdwg.mxu0
        %1035 = vmatprep.subr.bf16.mxu0 0
        %1036 = vmatpush1.bf16.msra.mxu0 %v991
        %1037 = vmatprep.subr.bf16.mxu0 0
        %1038 = vmatpush1.bf16.msra.mxu0 0
        %1039 = vmatprep.subr.bf16.mxu0 0
        %1040 = vmatpush1.bf16.msra.mxu0 0
        %1041 = vmatprep.subr.bf16.mxu0 0
        %1042 = vmatpush1.bf16.msra.mxu0 0
        %1043 = vmatprep.subr.bf16.mxu0 0
        %1044 = vmatpush1.bf16.msra.mxu0 0
        %1045 = vmatprep.subr.bf16.mxu0 0
        %1046 = vmatpush1.bf16.msra.mxu0 0
        %1047 = vmatprep.subr.bf16.mxu0 0
        %1048 = vmatpush1.bf16.msra.mxu0 0
        %1049 = vmatprep.subr.bf16.mxu0 0
        %1050 = vmatpush1.bf16.msra.mxu0 0
        %1051 = vmatprep.subr.bf16.mxu0 0
        %1052 = vmatpush1.bf16.msra.mxu0 0
        %1053 = vmatprep.subr.bf16.mxu0 0
        %1054 = vmatpush1.bf16.msra.mxu0 0
        %1055 = vmatprep.subr.bf16.mxu0 0
        %1056 = vmatpush1.bf16.msra.mxu0 0
        %1057 = vmatprep.subr.bf16.mxu0 0
        %1058 = vmatpush1.bf16.msra.mxu0 0
        %1059 = vmatprep.subr.bf16.mxu0 0
        %1060 = vmatpush1.bf16.msra.mxu0 0
        %1061 = vmatprep.subr.bf16.mxu0 0
        %1062 = vmatpush1.bf16.msra.mxu0 0
        %1063 = vmatprep.subr.bf16.mxu0 0
        %1064 = vmatpush1.bf16.msra.mxu0 0
        %1065 = vmatprep.subr.bf16.mxu0 0
        %1066 = vmatpush1.bf16.msra.mxu0 0
        %1067 = vmatprep.mubr.bf16.mxu0 0
        %1068 = vmatmul.mubr.bf16.gmra.mrb[0].mxu0 %v993
        %v1069 = vpop.f32.mrb[0].mxu0
        %v1070 = vadd.f32 0.0, %v1069
        %v1071 = vpop.f32.mrb[0].mxu0
        %v1072 = vpop.f32.mrb[0].mxu0
        %v1073 = vpop.f32.mrb[0].mxu0
        %1074 = vdwg.mxu0
        %1075 = vst.msk [vmem:[%s187] sm:$0xff] %vm681, %v1030
        %1076 = vst.msk [vmem:[%s187 + $0x8] sm:$0xff] %vm681, %v1070
        %s1077 = sand.u32 %s109, 1
        %s1078 = scalar_lea.sflag [#allocation3], %s1077
        %s1079 = sand.u32 %s109, 1
        %s1080 = smul.addr %s1079, 16
        %s1081 = scalar_lea.vmem [#allocation2], %s1080
        // Predicated region
        $region33: #{tpu_custom_call.1} parent=31 // pred_check
          %p1082 = pneg %p119
        $region34: #{tpu_custom_call.1} parent=31 // pred_check_branch
          %1084 = sbr.rel (%p1082) target = $region36
        $region35: #{tpu_custom_call.1} parent=31 // pred_region
          %s1086 = ssub.s32 256, 256
          %1087 = vsyncadd %s1078, %s1086
          %s1088 = smul.addr %s22, 2
          %s1089 = smul.addr %s21, 4
          %s1090 = sadd.s32 %s1088, %s1089
          %s1091 = smul.addr %s1090, 128
          %s1092 = scalar_lea.hbm %s3, %s1091
          %s1093 = sshll.u32 %s1081, 4
          %s1094 = int_to_ptr.vmem [resolvable:$true] %s1093
          %1099 = dma.vmem_to_hbm [thread:$0]  %s1094, 256, %s1092, %s1078, 128, 128, 8
        $region36: #{tpu_custom_call.1} parent=31 // pred_fallthru
          _
      $region32: #{tpu_custom_call.1} parent=5 // pred_fallthru
        _
      %p1100 = scmp.le.s32.totalorder 2, %s12
      // Predicated region
      $region37: #{tpu_custom_call.1} parent=5 // pred_check
        %p1101 = pneg %p1100
      $region38: #{tpu_custom_call.1} parent=5 // pred_check_branch
        %1103 = sbr.rel (%p1101) target = $region40
      $region39: #{tpu_custom_call.1} parent=5 // pred_region
        %s1104 = ssub.s32 %s12, 2
        // Predicated region
        $region41: #{tpu_custom_call.1} parent=39 // pred_check
          %p1105 = pneg %p125
        $region42: #{tpu_custom_call.1} parent=39 // pred_check_branch
          %1107 = sbr.rel (%p1105) target = $region44
        $region43: #{tpu_custom_call.1} parent=39 // pred_region
          %s1108 = sand.u32 %s110, 1
          %s1109 = scalar_lea.sflag [#allocation3], %s1108
          %s1110 = sand.u32 %s110, 1
          %s1111 = smul.addr %s1110, 16
          %s1112 = scalar_lea.vmem [#allocation2], %s1111
          %1113 = dma.done %s1109, 256
        $region44: #{tpu_custom_call.1} parent=39 // pred_fallthru
          _
      $region40: #{tpu_custom_call.1} parent=5 // pred_fallthru
        _
    $region6: #{tpu_custom_call.1} parent=1 // loop_footer
      %s16 = sadd.s32 1, %s12
    $region7: #{tpu_custom_call.1} parent=1 // loop_footer_branch
      %11 = sbr.rel target = $region3
    $region8: #{tpu_custom_call.1} parent=1 // loop_exit
      _
    %1114 = vsyncpa [#allocation3], 1
    %s1115 = scalar_lea.sflag [#allocation3], 1
    %1116 = vsyncpa %s1115, 1

</llo_original>
